<compile_context>
chip_gen: v7x
topology: tpu7x:2x2x1
jax: 0.10.0
libtpu: 0.0.40
codegen_flags: <defaults>
</compile_context>

<pallas_src>
import functools

import numpy as np
import jax
import jax.numpy as jnp
from jax.experimental import pallas as pl
from jax.experimental.pallas import tpu as pltpu

HIDDEN_DIM = 25
HIDDEN_DIM_1 = 40
OUTPUT_DIM = 10
N_CLASS = 2
LEAKY_SLOPE = 0.01
BN_EPS = 1e-5
COS_EPS = 1e-8
N_LAYERS = 6          # ae1, ae2, input, hidden1, hidden2, output

_VMEM = pl.BlockSpec(memory_space=pltpu.MemorySpace.VMEM)


def _round_up(x, m):
    return ((x + m - 1) // m) * m


# --------------------------------------------------------------------------
# Single fused kernel: batched embedding MLP, prototypes, cosine similarity.
# --------------------------------------------------------------------------
def _protonet_fused_kernel(x_ref, avg_ref, w_ref, b_ref, result_ref, aux_ref, *, s):
    """Refs:
      x_ref   : (S+Q, L)   packed support|query rows, zero-padded lanes >= input_dim
      avg_ref : (C, S+Q)   class-averaging matrix (zero columns for query rows)
      w_ref   : (6, L, L)  zero-padded weight slab (eval BN folded in)
      b_ref   : (6, 1, L)  zero-padded bias slab
      result_ref : (Q, C)  cosine similarities
      aux_ref    : (C+Q, L) lane-dense slab: rows [0:C]=prototypes, rows [C:]=query embeddings
    """
    x = x_ref[...]
    n, lane = x.shape

    def layer(i, v):
        return jnp.dot(v, w_ref[i], preferred_element_type=jnp.float32) + b_ref[i]

    # ---- embedding MLP: support and query rows in ONE batched pass --------
    # TODO(synk): `Autoencoder` is undefined in the source file; modeled as a
    # deterministic 2-layer linear AE (F -> F//2 -> F) with a ReLU bottleneck.
    h = jnp.maximum(layer(0, x), 0.0)
    x = layer(1, h)

    z = layer(2, x)                               # input_layer (+folded BN)
    z = jnp.maximum(z, LEAKY_SLOPE * z)           # LeakyReLU   (dropout = identity)
    z = jnp.maximum(layer(3, z), 0.0)             # hidden_layer_1 (+BN) -> ReLU
    z = layer(4, z)                               # hidden_layer_2 (+BN)
    z = jnp.maximum(z, LEAKY_SLOPE * z)           # LeakyReLU
    emb = layer(5, z)                             # (N, L); cols >= OUTPUT_DIM are zero

    # ---- prototypes: per-class mean via one (C,N) x (N,L) matmul ----------
    proto = jnp.dot(avg_ref[...], emb, preferred_element_type=jnp.float32)   # (C, L)

    # ---- cosine similarity -------------------------------------------------
    # MXU dot issues straight from emb/proto, independent of the norm chain.
    dots = jax.lax.dot_general(emb, proto, (((1,), (1,)), ((), ())),
                               preferred_element_type=jnp.float32)           # (N, C)
    q_sq = jnp.sum(emb * emb, axis=1, keepdims=True)                         # (N, 1)
    p_sq = jax.lax.dot_general(jnp.ones((1, lane), jnp.float32), proto * proto,
                               (((1,), (1,)), ((), ())),
                               preferred_element_type=jnp.float32)           # (1, C)
    # torch clamp: dot / (max(|q|,eps)*max(|p|,eps)) == dot*rsqrt(max(q2,eps^2))*rsqrt(max(p2,eps^2))
    q_inv = jax.lax.rsqrt(jnp.maximum(q_sq, COS_EPS * COS_EPS))
    p_inv = jax.lax.rsqrt(jnp.maximum(p_sq, COS_EPS * COS_EPS))
    result_ref[...] = (dots * q_inv * p_inv)[s:, :]                          # (Q, C)

    # ---- aux outputs (lane-dense; sliced to OUTPUT_DIM by the caller) -----
    c = proto.shape[0]
    aux_ref[pl.ds(0, c), :] = proto
    aux_ref[pl.ds(c, n - s), :] = emb[s:, :]


# --------------------------------------------------------------------------
# Wrapper
# --------------------------------------------------------------------------
@jax.jit
def _fused_forward(w_slab, b_slab, avg_mat, support_input, query_input):
    s, f = support_input.shape
    q = query_input.shape[0]
    c = avg_mat.shape[0]
    lane = w_slab.shape[-1]

    x = jnp.concatenate([support_input, query_input], axis=0).astype(jnp.float32)
    if f < lane:
        x = jnp.pad(x, ((0, 0), (0, lane - f)))

    kernel = functools.partial(_protonet_fused_kernel, s=s)
    result, aux = pl.pallas_call(
        kernel,
        out_shape=(jax.ShapeDtypeStruct((q, c), jnp.float32),
                   jax.ShapeDtypeStruct((c + q, lane), jnp.float32)),
        in_specs=[_VMEM, _VMEM, _VMEM, _VMEM],
        out_specs=(_VMEM, _VMEM),
    )(x, avg_mat, w_slab, b_slab)

    proto = aux[:c, :OUTPUT_DIM]
    qemb = aux[c:, :OUTPUT_DIM]
    return result, proto, qemb


@functools.lru_cache(maxsize=None)
def _make_avg_matrix(support_size, query_size, num_class):
    """(C, S+Q) matrix: row c averages the c-th contiguous support chunk.
    Like the PyTorch reference, remainder rows (support_size % num_class) are
    ignored, and query columns are zero."""
    counted = support_size // num_class
    m = np.zeros((num_class, support_size + query_size), np.float32)
    for cc in range(num_class):
        m[cc, cc * counted:(cc + 1) * counted] = 1.0 / counted
    return jnp.asarray(m)


def _fold_linear_bn(w, b, gamma, beta, rmean, rvar):
    """Fold eval-mode BatchNorm1d into the preceding Linear (exact)."""
    scale = gamma / np.sqrt(rvar + BN_EPS)
    return w * scale, b * scale + (beta - rmean * scale)


def init_params(key, input_dim, lane=None):
    """Deterministic parameter init (PyTorch nn.Linear-style uniform bounds),
    eval-mode BN folded in, packed into two zero-padded VMEM slabs."""
    if lane is None:
        lane = _round_up(max(input_dim, HIDDEN_DIM_1, 128), 128)
    keys = jax.random.split(key, 6)

    def lin(k, fan_in, fan_out):
        kw, kb = jax.random.split(k)
        bound = 1.0 / (fan_in ** 0.5)
        w = np.asarray(jax.random.uniform(kw, (fan_in, fan_out), jnp.float32, -bound, bound))
        b = np.asarray(jax.random.uniform(kb, (1, fan_out), jnp.float32, -bound, bound))
        return w, b

    def fresh_bn(dim):
        return (np.ones((1, dim), np.float32), np.zeros((1, dim), np.float32),
                np.zeros((1, dim), np.float32), np.ones((1, dim), np.float32))

    bottleneck = max(1, input_dim // 2)
    ae_w1, ae_b1 = lin(keys[0], input_dim, bottleneck)
    ae_w2, ae_b2 = lin(keys[1], bottleneck, input_dim)
    w0, b0 = lin(keys[2], input_dim, HIDDEN_DIM)
    w1, b1 = lin(keys[3], HIDDEN_DIM, HIDDEN_DIM_1)
    w2, b2 = lin(keys[4], HIDDEN_DIM_1, HIDDEN_DIM)
    w3, b3 = lin(keys[5], HIDDEN_DIM, OUTPUT_DIM)

    # NOTE: if trained BN running stats are available, fold them here instead.
    w0, b0 = _fold_linear_bn(w0, b0, *fresh_bn(HIDDEN_DIM))
    w1, b1 = _fold_linear_bn(w1, b1, *fresh_bn(HIDDEN_DIM_1))
    w2, b2 = _fold_linear_bn(w2, b2, *fresh_bn(HIDDEN_DIM))

    layers = [(ae_w1, ae_b1), (ae_w2, ae_b2), (w0, b0), (w1, b1), (w2, b2), (w3, b3)]
    w_slab = np.zeros((N_LAYERS, lane, lane), np.float32)
    b_slab = np.zeros((N_LAYERS, 1, lane), np.float32)
    for i, (w, b) in enumerate(layers):
        w_slab[i, :w.shape[0], :w.shape[1]] = w
        b_slab[i, :, :b.shape[1]] = b
    return {"w_slab": jnp.asarray(w_slab), "b_slab": jnp.asarray(b_slab)}


class ProtonetPallas:
    last_prototype_vectors = None
    query_embeddings_labels = []

    def __init__(self, params, num_class=N_CLASS, capture_host_outputs=False):
        self.params = params
        self.num_class = num_class
        # True restores the original per-forward device->host sync of the class
        # attributes; default False keeps them as device arrays (no sync) and
        # sync_host_outputs() pulls them once on demand.
        self.capture_host_outputs = capture_host_outputs
        self._last_qemb = None
        self._last_qlab = None

    def forward(self, support_input, query_input, query_label):
        s = int(support_input.shape[0])
        q = int(query_input.shape[0])
        avg_mat = _make_avg_matrix(s, q, self.num_class)
        result, proto, qemb = _fused_forward(
            self.params["w_slab"], self.params["b_slab"], avg_mat,
            support_input, query_input)

        ProtonetPallas.last_prototype_vectors = proto     # device array, no sync
        self._last_qemb = qemb
        self._last_qlab = query_label
        if self.capture_host_outputs:
            self.sync_host_outputs()
        return result

    def sync_host_outputs(self):
        proto_np, qemb_np, qlab_np = jax.device_get(
            (ProtonetPallas.last_prototype_vectors, self._last_qemb, self._last_qlab))
        ProtonetPallas.last_prototype_vectors = proto_np
        ProtonetPallas.query_embeddings_labels = list(zip(qemb_np, qlab_np))
        return proto_np, ProtonetPallas.query_embeddings_labels


# --------------------------------------------------------------------------
# Plain-numpy reference of the identical math (for a sanity check in main).
# --------------------------------------------------------------------------
def _reference_forward(w_slab, b_slab, avg_mat, support_input, query_input):
    w, b, avg = np.asarray(w_slab), np.asarray(b_slab), np.asarray(avg_mat)
    s = support_input.shape[0]
    lane = w.shape[-1]
    x = np.concatenate([np.asarray(support_input), np.asarray(query_input)], axis=0)
    x = np.pad(x, ((0, 0), (0, lane - x.shape[1])))
    h = np.maximum(x @ w[0] + b[0], 0.0)
    x = h @ w[1] + b[1]
    z = x @ w[2] + b[2]; z = np.maximum(z, LEAKY_SLOPE * z)
    z = np.maximum(z @ w[3] + b[3], 0.0)
    z = z @ w[4] + b[4]; z = np.maximum(z, LEAKY_SLOPE * z)
    emb = z @ w[5] + b[5]
    proto = avg @ emb
    qe = emb[s:]
    qn = np.maximum(np.linalg.norm(qe, axis=1, keepdims=True), COS_EPS)
    pn = np.maximum(np.linalg.norm(proto, axis=1, keepdims=True), COS_EPS)
    return (qe / qn) @ (proto / pn).T


if __name__ == "__main__":
    key = jax.random.PRNGKey(0)
    k_param, k_sup, k_qry = jax.random.split(key, 3)

    input_dim = 16     # stands in for X_sorted.shape[1]
    n_support = 8      # 4 support samples per class; multiple of 8 -> tile-aligned slice
    n_query = 6

    params = init_params(k_param, input_dim)
    support_input = jax.random.normal(k_sup, (n_support, input_dim), jnp.float32)
    query_input = jax.random.normal(k_qry, (n_query, input_dim), jnp.float32)
    query_label = jnp.array([0, 1, 0, 1, 0, 1], jnp.int32)

    model = ProtonetPallas(params, num_class=N_CLASS)
    result = model.forward(support_input, query_input, query_label)
    result = jax.block_until_ready(result)

    # Correctness check against a plain-numpy reference of the same math.
    avg = _make_avg_matrix(n_support, n_query, N_CLASS)
    ref = _reference_forward(params["w_slab"], params["b_slab"], avg,
                             support_input, query_input)
    np.testing.assert_allclose(np.asarray(result), ref, rtol=2e-3, atol=2e-3)

    protos, qel = model.sync_host_outputs()   # single, explicit host sync
    assert result.shape == (n_query, N_CLASS)
    assert protos.shape == (N_CLASS, OUTPUT_DIM)
    assert len(qel) == n_query
    print("KERNEL_OK")
</pallas_src>

<mosaic_0001>
module attributes {stable_mosaic.version = 11 : i64} {
  func.func @_protonet_fused_kernel(%arg0: memref<14x128xf32, #tpu.memory_space<vmem>>, %arg1: memref<2x14xf32, #tpu.memory_space<vmem>>, %arg2: memref<6x128x128xf32, #tpu.memory_space<vmem>>, %arg3: memref<6x1x128xf32, #tpu.memory_space<vmem>>, %arg4: memref<6x2xf32, #tpu.memory_space<vmem>>, %arg5: memref<8x128xf32, #tpu.memory_space<vmem>>) attributes {dimension_semantics = [], scalar_prefetch = 0 : i64, scratch_operands = 0 : i64, tpu.core_type = #tpu.core_type<tc>} {
    %c0 = arith.constant 0 : index
    %c0_0 = arith.constant 0 : index
    %0 = vector.load %arg0[%c0, %c0_0] : memref<14x128xf32, #tpu.memory_space<vmem>>, vector<14x128xf32>
    %c0_1 = arith.constant 0 : index
    %c0_2 = arith.constant 0 : index
    %c0_3 = arith.constant 0 : index
    %1 = vector.load %arg2[%c0_1, %c0_2, %c0_3] : memref<6x128x128xf32, #tpu.memory_space<vmem>>, vector<1x128x128xf32>
    %2 = vector.shape_cast %1 : vector<1x128x128xf32> to vector<128x128xf32>
    %cst = arith.constant dense<0.000000e+00> : vector<14x128xf32>
    %3 = tpu.matmul %0, %2, %cst {dimension_numbers = #tpu.dot_dimension_numbers<[1], [0], [0], [1], [0, 0, 1, 1], [], []>} : vector<14x128xf32>, vector<128x128xf32>, vector<14x128xf32> -> vector<14x128xf32>
    %c0_4 = arith.constant 0 : index
    %c0_5 = arith.constant 0 : index
    %c0_6 = arith.constant 0 : index
    %4 = vector.load %arg3[%c0_4, %c0_5, %c0_6] : memref<6x1x128xf32, #tpu.memory_space<vmem>>, vector<1x1x128xf32>
    %5 = vector.shape_cast %4 : vector<1x1x128xf32> to vector<1x128xf32>
    %6 = vector.broadcast %5 : vector<1x128xf32> to vector<14x128xf32>
    %7 = arith.addf %3, %6 : vector<14x128xf32>
    %cst_7 = arith.constant 0.000000e+00 : f32
    %8 = vector.broadcast %cst_7 : f32 to vector<14x128xf32>
    %9 = arith.maximumf %7, %8 : vector<14x128xf32>
    %c1 = arith.constant 1 : index
    %c0_8 = arith.constant 0 : index
    %c0_9 = arith.constant 0 : index
    %10 = vector.load %arg2[%c1, %c0_8, %c0_9] : memref<6x128x128xf32, #tpu.memory_space<vmem>>, vector<1x128x128xf32>
    %11 = vector.shape_cast %10 : vector<1x128x128xf32> to vector<128x128xf32>
    %cst_10 = arith.constant dense<0.000000e+00> : vector<14x128xf32>
    %12 = tpu.matmul %9, %11, %cst_10 {dimension_numbers = #tpu.dot_dimension_numbers<[1], [0], [0], [1], [0, 0, 1, 1], [], []>} : vector<14x128xf32>, vector<128x128xf32>, vector<14x128xf32> -> vector<14x128xf32>
    %c1_11 = arith.constant 1 : index
    %c0_12 = arith.constant 0 : index
    %c0_13 = arith.constant 0 : index
    %13 = vector.load %arg3[%c1_11, %c0_12, %c0_13] : memref<6x1x128xf32, #tpu.memory_space<vmem>>, vector<1x1x128xf32>
    %14 = vector.shape_cast %13 : vector<1x1x128xf32> to vector<1x128xf32>
    %15 = vector.broadcast %14 : vector<1x128xf32> to vector<14x128xf32>
    %16 = arith.addf %12, %15 : vector<14x128xf32>
    %c2 = arith.constant 2 : index
    %c0_14 = arith.constant 0 : index
    %c0_15 = arith.constant 0 : index
    %17 = vector.load %arg2[%c2, %c0_14, %c0_15] : memref<6x128x128xf32, #tpu.memory_space<vmem>>, vector<1x128x128xf32>
    %18 = vector.shape_cast %17 : vector<1x128x128xf32> to vector<128x128xf32>
    %cst_16 = arith.constant dense<0.000000e+00> : vector<14x128xf32>
    %19 = tpu.matmul %16, %18, %cst_16 {dimension_numbers = #tpu.dot_dimension_numbers<[1], [0], [0], [1], [0, 0, 1, 1], [], []>} : vector<14x128xf32>, vector<128x128xf32>, vector<14x128xf32> -> vector<14x128xf32>
    %c2_17 = arith.constant 2 : index
    %c0_18 = arith.constant 0 : index
    %c0_19 = arith.constant 0 : index
    %20 = vector.load %arg3[%c2_17, %c0_18, %c0_19] : memref<6x1x128xf32, #tpu.memory_space<vmem>>, vector<1x1x128xf32>
    %21 = vector.shape_cast %20 : vector<1x1x128xf32> to vector<1x128xf32>
    %22 = vector.broadcast %21 : vector<1x128xf32> to vector<14x128xf32>
    %23 = arith.addf %19, %22 : vector<14x128xf32>
    %cst_20 = arith.constant 0.00999999977 : f32
    %24 = vector.broadcast %cst_20 : f32 to vector<14x128xf32>
    %25 = arith.mulf %24, %23 : vector<14x128xf32>
    %26 = arith.maximumf %23, %25 : vector<14x128xf32>
    %c3 = arith.constant 3 : index
    %c0_21 = arith.constant 0 : index
    %c0_22 = arith.constant 0 : index
    %27 = vector.load %arg2[%c3, %c0_21, %c0_22] : memref<6x128x128xf32, #tpu.memory_space<vmem>>, vector<1x128x128xf32>
    %28 = vector.shape_cast %27 : vector<1x128x128xf32> to vector<128x128xf32>
    %cst_23 = arith.constant dense<0.000000e+00> : vector<14x128xf32>
    %29 = tpu.matmul %26, %28, %cst_23 {dimension_numbers = #tpu.dot_dimension_numbers<[1], [0], [0], [1], [0, 0, 1, 1], [], []>} : vector<14x128xf32>, vector<128x128xf32>, vector<14x128xf32> -> vector<14x128xf32>
    %c3_24 = arith.constant 3 : index
    %c0_25 = arith.constant 0 : index
    %c0_26 = arith.constant 0 : index
    %30 = vector.load %arg3[%c3_24, %c0_25, %c0_26] : memref<6x1x128xf32, #tpu.memory_space<vmem>>, vector<1x1x128xf32>
    %31 = vector.shape_cast %30 : vector<1x1x128xf32> to vector<1x128xf32>
    %32 = vector.broadcast %31 : vector<1x128xf32> to vector<14x128xf32>
    %33 = arith.addf %29, %32 : vector<14x128xf32>
    %cst_27 = arith.constant 0.000000e+00 : f32
    %34 = vector.broadcast %cst_27 : f32 to vector<14x128xf32>
    %35 = arith.maximumf %33, %34 : vector<14x128xf32>
    %c4 = arith.constant 4 : index
    %c0_28 = arith.constant 0 : index
    %c0_29 = arith.constant 0 : index
    %36 = vector.load %arg2[%c4, %c0_28, %c0_29] : memref<6x128x128xf32, #tpu.memory_space<vmem>>, vector<1x128x128xf32>
    %37 = vector.shape_cast %36 : vector<1x128x128xf32> to vector<128x128xf32>
    %cst_30 = arith.constant dense<0.000000e+00> : vector<14x128xf32>
    %38 = tpu.matmul %35, %37, %cst_30 {dimension_numbers = #tpu.dot_dimension_numbers<[1], [0], [0], [1], [0, 0, 1, 1], [], []>} : vector<14x128xf32>, vector<128x128xf32>, vector<14x128xf32> -> vector<14x128xf32>
    %c4_31 = arith.constant 4 : index
    %c0_32 = arith.constant 0 : index
    %c0_33 = arith.constant 0 : index
    %39 = vector.load %arg3[%c4_31, %c0_32, %c0_33] : memref<6x1x128xf32, #tpu.memory_space<vmem>>, vector<1x1x128xf32>
    %40 = vector.shape_cast %39 : vector<1x1x128xf32> to vector<1x128xf32>
    %41 = vector.broadcast %40 : vector<1x128xf32> to vector<14x128xf32>
    %42 = arith.addf %38, %41 : vector<14x128xf32>
    %cst_34 = arith.constant 0.00999999977 : f32
    %43 = vector.broadcast %cst_34 : f32 to vector<14x128xf32>
    %44 = arith.mulf %43, %42 : vector<14x128xf32>
    %45 = arith.maximumf %42, %44 : vector<14x128xf32>
    %c5 = arith.constant 5 : index
    %c0_35 = arith.constant 0 : index
    %c0_36 = arith.constant 0 : index
    %46 = vector.load %arg2[%c5, %c0_35, %c0_36] : memref<6x128x128xf32, #tpu.memory_space<vmem>>, vector<1x128x128xf32>
    %47 = vector.shape_cast %46 : vector<1x128x128xf32> to vector<128x128xf32>
    %cst_37 = arith.constant dense<0.000000e+00> : vector<14x128xf32>
    %48 = tpu.matmul %45, %47, %cst_37 {dimension_numbers = #tpu.dot_dimension_numbers<[1], [0], [0], [1], [0, 0, 1, 1], [], []>} : vector<14x128xf32>, vector<128x128xf32>, vector<14x128xf32> -> vector<14x128xf32>
    %c5_38 = arith.constant 5 : index
    %c0_39 = arith.constant 0 : index
    %c0_40 = arith.constant 0 : index
    %49 = vector.load %arg3[%c5_38, %c0_39, %c0_40] : memref<6x1x128xf32, #tpu.memory_space<vmem>>, vector<1x1x128xf32>
    %50 = vector.shape_cast %49 : vector<1x1x128xf32> to vector<1x128xf32>
    %51 = vector.broadcast %50 : vector<1x128xf32> to vector<14x128xf32>
    %52 = arith.addf %48, %51 : vector<14x128xf32>
    %c0_41 = arith.constant 0 : index
    %c0_42 = arith.constant 0 : index
    %53 = vector.load %arg1[%c0_41, %c0_42] : memref<2x14xf32, #tpu.memory_space<vmem>>, vector<2x14xf32>
    %cst_43 = arith.constant dense<0.000000e+00> : vector<2x128xf32>
    %54 = tpu.matmul %53, %52, %cst_43 {dimension_numbers = #tpu.dot_dimension_numbers<[1], [0], [0], [1], [0, 0, 1, 1], [], []>} : vector<2x14xf32>, vector<14x128xf32>, vector<2x128xf32> -> vector<2x128xf32>
    %cst_44 = arith.constant dense<0.000000e+00> : vector<14x2xf32>
    %55 = tpu.matmul %52, %54, %cst_44 {dimension_numbers = #tpu.dot_dimension_numbers<[1], [1], [0], [0], [0, 0, 1, 0], [], []>} : vector<14x128xf32>, vector<2x128xf32>, vector<14x2xf32> -> vector<14x2xf32>
    %56 = arith.mulf %52, %52 : vector<14x128xf32>
    %cst_45 = arith.constant dense<0.000000e+00> : vector<14xf32>
    %57 = vector.multi_reduction <add>, %56, %cst_45 [1] : vector<14x128xf32> to vector<14xf32>
    %58 = vector.shape_cast %57 : vector<14xf32> to vector<14x1xf32>
    %cst_46 = arith.constant 1.000000e+00 : f32
    %59 = vector.broadcast %cst_46 : f32 to vector<1x128xf32>
    %60 = arith.mulf %54, %54 : vector<2x128xf32>
    %cst_47 = arith.constant dense<0.000000e+00> : vector<1x2xf32>
    %61 = tpu.matmul %59, %60, %cst_47 {dimension_numbers = #tpu.dot_dimension_numbers<[1], [1], [0], [0], [0, 0, 1, 0], [], []>} : vector<1x128xf32>, vector<2x128xf32>, vector<1x2xf32> -> vector<1x2xf32>
    %cst_48 = arith.constant 1.000000e-16 : f32
    %62 = vector.broadcast %cst_48 : f32 to vector<14x1xf32>
    %63 = arith.maximumf %58, %62 : vector<14x1xf32>
    %64 = math.rsqrt %63 : vector<14x1xf32>
    %cst_49 = arith.constant 1.000000e-16 : f32
    %65 = vector.broadcast %cst_49 : f32 to vector<1x2xf32>
    %66 = arith.maximumf %61, %65 : vector<1x2xf32>
    %67 = math.rsqrt %66 : vector<1x2xf32>
    %68 = vector.broadcast %64 : vector<14x1xf32> to vector<14x2xf32>
    %69 = arith.mulf %55, %68 : vector<14x2xf32>
    %70 = vector.broadcast %67 : vector<1x2xf32> to vector<14x2xf32>
    %71 = arith.mulf %69, %70 : vector<14x2xf32>
    %72 = vector.extract_strided_slice %71 {offsets = [8, 0], sizes = [6, 2], strides = [1, 1]} : vector<14x2xf32> to vector<6x2xf32>
    %c0_50 = arith.constant 0 : index
    %c0_51 = arith.constant 0 : index
    %73 = vector.load %arg4[%c0_50, %c0_51] : memref<6x2xf32, #tpu.memory_space<vmem>>, vector<6x2xf32>
    tpu.vector_store %arg4[%c0_50, %c0_51], %72 {strides = array<i32>} : memref<6x2xf32, #tpu.memory_space<vmem>>, vector<6x2xf32>,
    %c0_52 = arith.constant 0 : index
    %c0_53 = arith.constant 0 : index
    %74 = vector.load %arg5[%c0_52, %c0_53] : memref<8x128xf32, #tpu.memory_space<vmem>>, vector<2x128xf32>
    tpu.vector_store %arg5[%c0_52, %c0_53], %54 {strides = array<i32>} : memref<8x128xf32, #tpu.memory_space<vmem>>, vector<2x128xf32>,
    %75 = vector.extract_strided_slice %52 {offsets = [8, 0], sizes = [6, 128], strides = [1, 1]} : vector<14x128xf32> to vector<6x128xf32>
    %c2_54 = arith.constant 2 : index
    %c0_55 = arith.constant 0 : index
    %76 = vector.load %arg5[%c2_54, %c0_55] : memref<8x128xf32, #tpu.memory_space<vmem>>, vector<6x128xf32>
    tpu.vector_store %arg5[%c2_54, %c0_55], %75 {strides = array<i32>} : memref<8x128xf32, #tpu.memory_space<vmem>>, vector<6x128xf32>,
    return
  }
}

</mosaic_0001>

<llo_original>
// kernel: _fused_forward.1
$region0: #{_fused_forward.1}
  #allocation0 [shape = 'u32[]', space=smem, size = 0x4, offset = 0x4, fixed_abs, tag = 'smem constant byte address 0x4 - core index']
  #allocation1 [shape = 'u32[144,128]{1,0:T(1,128)}', space=vmem, size = 0x12000, scoped, tag = 'internal scratch']
  %s0 = inlined_call_operand.vmem [shape: f32[14,128], index: 0, kind: input, shape index: {}]
  %s1 = inlined_call_operand.vmem [shape: f32[2,14], index: 1, kind: input, shape index: {}]
  %s2 = inlined_call_operand.hbm [shape: f32[6,128,128], index: 2, kind: input, shape index: {}]
  %s3 = inlined_call_operand.vmem [shape: f32[6,1,128], index: 3, kind: input, shape index: {}]
  %s4 = inlined_call_operand.vmem [shape: f32[6,2], index: 4, kind: output, shape index: {0}]
  %s5 = inlined_call_operand.vmem [shape: f32[8,128], index: 5, kind: output, shape index: {1}]
  %6 = xla_tuple %s4, %s5
  %s7 = sld [smem:[#allocation0]]
  $region38: #{_fused_forward.1} parent=0
    _
  %s9 = ssub.s32 1, %s7
  %s10 = scalar_select 0, %s9, %s7
  $region1: #{_fused_forward.1} parent=0
    #allocation2 [shape = 'u8[393216]{0}', space=vmem, size = 0x60000, scoped, tag = 'input window, operand 2, single buffered']
    #allocation3 [shape = 's32[1]{0}', space=sflag, size = 0x4, scoped, tag = 'scoped memory for _fused_forward.1']
    %11 = vsyncpa [#allocation3], 0
    // Predicated region
    $region2: #{_fused_forward.1} parent=1 // pred_check
      _
    $region3: #{_fused_forward.1} parent=1 // pred_check_branch
      %13 = sbr.rel (0) target = $region5
    $region4: #{_fused_forward.1} parent=1 // pred_region
      _
    $region5: #{_fused_forward.1} parent=1 // pred_fallthru
      _
    // Predicated region
    $region6: #{_fused_forward.1} parent=1 // pred_check
      _
    $region7: #{_fused_forward.1} parent=1 // pred_check_branch
      %15 = sbr.rel (0) target = $region9
    $region8: #{_fused_forward.1} parent=1 // pred_region
      _
    $region9: #{_fused_forward.1} parent=1 // pred_fallthru
      _
    // Predicated region
    $region10: #{_fused_forward.1} parent=1 // pred_check
      _
    $region11: #{_fused_forward.1} parent=1 // pred_check_branch
      %17 = sbr.rel (0) target = $region13
    $region12: #{_fused_forward.1} parent=1 // pred_region
      %s19 = ssub.s32 12288, 12288
      %20 = vsyncadd [#allocation3], %s19
      %s21 = sshll.u32 [#allocation2], 4
      %s22 = int_to_ptr.vmem [resolvable:$true] %s21
      %27 = dma.hbm_to_vmem [thread:$0]  %s2, 12288, %s22, [#allocation3], 128, 128, 8
    $region13: #{_fused_forward.1} parent=1 // pred_fallthru
      _
    // Predicated region
    $region14: #{_fused_forward.1} parent=1 // pred_check
      _
    $region15: #{_fused_forward.1} parent=1 // pred_check_branch
      %29 = sbr.rel (0) target = $region17
    $region16: #{_fused_forward.1} parent=1 // pred_region
      _
    $region17: #{_fused_forward.1} parent=1 // pred_fallthru
      _
    // Predicated region
    $region18: #{_fused_forward.1} parent=1 // pred_check
      _
    $region19: #{_fused_forward.1} parent=1 // pred_check_branch
      %31 = sbr.rel (0) target = $region21
    $region20: #{_fused_forward.1} parent=1 // pred_region
      %32 = dma.done [#allocation3], 12288
    $region21: #{_fused_forward.1} parent=1 // pred_fallthru
      _
    %v33 = vld [vmem:[%s0] sm:$0xff]
    %v34 = vld [vmem:[%s0 + $0x8] sm:$0x3f]
    %v35 = vld [vmem:[#allocation2] sm:$0xff]
    %v36 = vld [vmem:[#allocation2 + $0x8] sm:$0xff]
    %v37 = vld [vmem:[#allocation2 + $0x10] sm:$0xff]
    %v38 = vld [vmem:[#allocation2 + $0x18] sm:$0xff]
    %v39 = vld [vmem:[#allocation2 + $0x20] sm:$0xff]
    %v40 = vld [vmem:[#allocation2 + $0x28] sm:$0xff]
    %v41 = vld [vmem:[#allocation2 + $0x30] sm:$0xff]
    %v42 = vld [vmem:[#allocation2 + $0x38] sm:$0xff]
    %v43 = vld [vmem:[#allocation2 + $0x40] sm:$0xff]
    %v44 = vld [vmem:[#allocation2 + $0x48] sm:$0xff]
    %v45 = vld [vmem:[#allocation2 + $0x50] sm:$0xff]
    %v46 = vld [vmem:[#allocation2 + $0x58] sm:$0xff]
    %v47 = vld [vmem:[#allocation2 + $0x60] sm:$0xff]
    %v48 = vld [vmem:[#allocation2 + $0x68] sm:$0xff]
    %v49 = vld [vmem:[#allocation2 + $0x70] sm:$0xff]
    %v50 = vld [vmem:[#allocation2 + $0x78] sm:$0xff]
    %v51 = vld [vmem:[%s3] sm:$0x1]
    %v53 = vlaneseq
    %v54 = vshrl.u32 %v53, 7
    %v55 = vsub.s32 0, %v54
    %v56 = vrot.slane %v51, %v55
    %58 = vmatprep.subr.mxu0 0.0
    %59 = vmatpush1.msra.mxu0 %v35
    %60 = vmatprep.subr.mxu0 0.0
    %61 = vmatpush1.msra.mxu0 %v36
    %62 = vmatprep.subr.mxu0 0.0
    %63 = vmatpush1.msra.mxu0 %v37
    %64 = vmatprep.subr.mxu0 0.0
    %65 = vmatpush1.msra.mxu0 %v38
    %66 = vmatprep.subr.mxu0 0.0
    %67 = vmatpush1.msra.mxu0 %v39
    %68 = vmatprep.subr.mxu0 0.0
    %69 = vmatpush1.msra.mxu0 %v40
    %70 = vmatprep.subr.mxu0 0.0
    %71 = vmatpush1.msra.mxu0 %v41
    %72 = vmatprep.subr.mxu0 0.0
    %73 = vmatpush1.msra.mxu0 %v42
    %74 = vmatprep.subr.mxu0 0.0
    %75 = vmatpush1.msra.mxu0 %v43
    %76 = vmatprep.subr.mxu0 0.0
    %77 = vmatpush1.msra.mxu0 %v44
    %78 = vmatprep.subr.mxu0 0.0
    %79 = vmatpush1.msra.mxu0 %v45
    %80 = vmatprep.subr.mxu0 0.0
    %81 = vmatpush1.msra.mxu0 %v46
    %82 = vmatprep.subr.mxu0 0.0
    %83 = vmatpush1.msra.mxu0 %v47
    %84 = vmatprep.subr.mxu0 0.0
    %85 = vmatpush1.msra.mxu0 %v48
    %86 = vmatprep.subr.mxu0 0.0
    %87 = vmatpush1.msra.mxu0 %v49
    %88 = vmatprep.subr.mxu0 0.0
    %89 = vmatpush1.msra.mxu0 %v50
    %90 = vmatprep.subr.mxu0 0.0
    %91 = vmatpush1.msra.mxu0 0.0
    %92 = vmatprep.subr.mxu0 0.0
    %93 = vmatpush1.msra.mxu0 0.0
    %94 = vmatprep.subr.mxu0 0.0
    %95 = vmatpush1.msra.mxu0 0.0
    %96 = vmatprep.subr.mxu0 0.0
    %97 = vmatpush1.msra.mxu0 0.0
    %98 = vmatprep.subr.mxu0 0.0
    %99 = vmatpush1.msra.mxu0 0.0
    %100 = vmatprep.subr.mxu0 0.0
    %101 = vmatpush1.msra.mxu0 0.0
    %102 = vmatprep.subr.mxu0 0.0
    %103 = vmatpush1.msra.mxu0 0.0
    %104 = vmatprep.subr.mxu0 0.0
    %105 = vmatpush1.msra.mxu0 0.0
    %106 = vmatprep.subr.mxu0 0.0
    %107 = vmatpush1.msra.mxu0 0.0
    %108 = vmatprep.subr.mxu0 0.0
    %109 = vmatpush1.msra.mxu0 0.0
    %110 = vmatprep.subr.mxu0 0.0
    %111 = vmatpush1.msra.mxu0 0.0
    %112 = vmatprep.subr.mxu0 0.0
    %113 = vmatpush1.msra.mxu0 0.0
    %114 = vmatprep.subr.mxu0 0.0
    %115 = vmatpush1.msra.mxu0 0.0
    %116 = vmatprep.subr.mxu0 0.0
    %117 = vmatpush1.msra.mxu0 0.0
    %118 = vmatprep.subr.mxu0 0.0
    %119 = vmatpush1.msra.mxu0 0.0
    %120 = vmatprep.subr.mxu0 0.0
    %121 = vmatpush1.msra.mxu0 0.0
    %122 = vmatprep.mubr.f32.mxu0 0.0
    %123 = vmatmul.mubr.f32.gmra.mrb[0].mxu0 %v33
    %v124 = vpop.f32.mrb[0].mxu0
    %v125 = vadd.f32 %v56, %v124
    %v126 = vpop.f32.mrb[0].mxu0
    %127 = vmatprep.mubr.f32.mxu0 0.0
    %128 = vmatmul.mubr.f32.gmra.mrb[0].mxu0 %v34
    %v129 = vpop.f32.mrb[0].mxu0
    %v130 = vadd.f32 %v56, %v129
    %v131 = vpop.f32.mrb[0].mxu0
    %132 = vdwg.mxu0
    %v133 = vmax.f32 %v125, 0.0
    %v134 = vmax.f32 %v130, 0.0
    %s135 = scalar_lea.vmem [#allocation2], 128
    %v136 = vld [vmem:[%s135] sm:$0xff]
    %v137 = vld [vmem:[%s135 + $0x8] sm:$0xff]
    %v138 = vld [vmem:[%s135 + $0x10] sm:$0xff]
    %v139 = vld [vmem:[%s135 + $0x18] sm:$0xff]
    %v140 = vld [vmem:[%s135 + $0x20] sm:$0xff]
    %v141 = vld [vmem:[%s135 + $0x28] sm:$0xff]
    %v142 = vld [vmem:[%s135 + $0x30] sm:$0xff]
    %v143 = vld [vmem:[%s135 + $0x38] sm:$0xff]
    %v144 = vld [vmem:[%s135 + $0x40] sm:$0xff]
    %v145 = vld [vmem:[%s135 + $0x48] sm:$0xff]
    %v146 = vld [vmem:[%s135 + $0x50] sm:$0xff]
    %v147 = vld [vmem:[%s135 + $0x58] sm:$0xff]
    %v148 = vld [vmem:[%s135 + $0x60] sm:$0xff]
    %v149 = vld [vmem:[%s135 + $0x68] sm:$0xff]
    %v150 = vld [vmem:[%s135 + $0x70] sm:$0xff]
    %v151 = vld [vmem:[%s135 + $0x78] sm:$0xff]
    %s152 = scalar_lea.vmem %s3, 1
    %v153 = vld [vmem:[%s152] sm:$0x1]
    %v155 = vlaneseq
    %v156 = vshrl.u32 %v155, 7
    %v157 = vsub.s32 0, %v156
    %v158 = vrot.slane %v153, %v157
    %160 = vmatprep.subr.mxu0 0.0
    %161 = vmatpush1.msra.mxu0 %v136
    %162 = vmatprep.subr.mxu0 0.0
    %163 = vmatpush1.msra.mxu0 %v137
    %164 = vmatprep.subr.mxu0 0.0
    %165 = vmatpush1.msra.mxu0 %v138
    %166 = vmatprep.subr.mxu0 0.0
    %167 = vmatpush1.msra.mxu0 %v139
    %168 = vmatprep.subr.mxu0 0.0
    %169 = vmatpush1.msra.mxu0 %v140
    %170 = vmatprep.subr.mxu0 0.0
    %171 = vmatpush1.msra.mxu0 %v141
    %172 = vmatprep.subr.mxu0 0.0
    %173 = vmatpush1.msra.mxu0 %v142
    %174 = vmatprep.subr.mxu0 0.0
    %175 = vmatpush1.msra.mxu0 %v143
    %176 = vmatprep.subr.mxu0 0.0
    %177 = vmatpush1.msra.mxu0 %v144
    %178 = vmatprep.subr.mxu0 0.0
    %179 = vmatpush1.msra.mxu0 %v145
    %180 = vmatprep.subr.mxu0 0.0
    %181 = vmatpush1.msra.mxu0 %v146
    %182 = vmatprep.subr.mxu0 0.0
    %183 = vmatpush1.msra.mxu0 %v147
    %184 = vmatprep.subr.mxu0 0.0
    %185 = vmatpush1.msra.mxu0 %v148
    %186 = vmatprep.subr.mxu0 0.0
    %187 = vmatpush1.msra.mxu0 %v149
    %188 = vmatprep.subr.mxu0 0.0
    %189 = vmatpush1.msra.mxu0 %v150
    %190 = vmatprep.subr.mxu0 0.0
    %191 = vmatpush1.msra.mxu0 %v151
    %192 = vmatprep.subr.mxu0 0.0
    %193 = vmatpush1.msra.mxu0 0.0
    %194 = vmatprep.subr.mxu0 0.0
    %195 = vmatpush1.msra.mxu0 0.0
    %196 = vmatprep.subr.mxu0 0.0
    %197 = vmatpush1.msra.mxu0 0.0
    %198 = vmatprep.subr.mxu0 0.0
    %199 = vmatpush1.msra.mxu0 0.0
    %200 = vmatprep.subr.mxu0 0.0
    %201 = vmatpush1.msra.mxu0 0.0
    %202 = vmatprep.subr.mxu0 0.0
    %203 = vmatpush1.msra.mxu0 0.0
    %204 = vmatprep.subr.mxu0 0.0
    %205 = vmatpush1.msra.mxu0 0.0
    %206 = vmatprep.subr.mxu0 0.0
    %207 = vmatpush1.msra.mxu0 0.0
    %208 = vmatprep.subr.mxu0 0.0
    %209 = vmatpush1.msra.mxu0 0.0
    %210 = vmatprep.subr.mxu0 0.0
    %211 = vmatpush1.msra.mxu0 0.0
    %212 = vmatprep.subr.mxu0 0.0
    %213 = vmatpush1.msra.mxu0 0.0
    %214 = vmatprep.subr.mxu0 0.0
    %215 = vmatpush1.msra.mxu0 0.0
    %216 = vmatprep.subr.mxu0 0.0
    %217 = vmatpush1.msra.mxu0 0.0
    %218 = vmatprep.subr.mxu0 0.0
    %219 = vmatpush1.msra.mxu0 0.0
    %220 = vmatprep.subr.mxu0 0.0
    %221 = vmatpush1.msra.mxu0 0.0
    %222 = vmatprep.subr.mxu0 0.0
    %223 = vmatpush1.msra.mxu0 0.0
    %224 = vmatprep.mubr.f32.mxu0 0.0
    %225 = vmatmul.mubr.f32.gmra.mrb[0].mxu0 %v133
    %v226 = vpop.f32.mrb[0].mxu0
    %v227 = vadd.f32 %v158, %v226
    %v228 = vpop.f32.mrb[0].mxu0
    %229 = vmatprep.mubr.f32.mxu0 0.0
    %230 = vmatmul.mubr.f32.gmra.mrb[0].mxu0 %v134
    %v231 = vpop.f32.mrb[0].mxu0
    %v232 = vadd.f32 %v158, %v231
    %v233 = vpop.f32.mrb[0].mxu0
    %234 = vdwg.mxu0
    %s235 = scalar_lea.vmem [#allocation2], 256
    %v236 = vld [vmem:[%s235] sm:$0xff]
    %v237 = vld [vmem:[%s235 + $0x8] sm:$0xff]
    %v238 = vld [vmem:[%s235 + $0x10] sm:$0xff]
    %v239 = vld [vmem:[%s235 + $0x18] sm:$0xff]
    %v240 = vld [vmem:[%s235 + $0x20] sm:$0xff]
    %v241 = vld [vmem:[%s235 + $0x28] sm:$0xff]
    %v242 = vld [vmem:[%s235 + $0x30] sm:$0xff]
    %v243 = vld [vmem:[%s235 + $0x38] sm:$0xff]
    %v244 = vld [vmem:[%s235 + $0x40] sm:$0xff]
    %v245 = vld [vmem:[%s235 + $0x48] sm:$0xff]
    %v246 = vld [vmem:[%s235 + $0x50] sm:$0xff]
    %v247 = vld [vmem:[%s235 + $0x58] sm:$0xff]
    %v248 = vld [vmem:[%s235 + $0x60] sm:$0xff]
    %v249 = vld [vmem:[%s235 + $0x68] sm:$0xff]
    %v250 = vld [vmem:[%s235 + $0x70] sm:$0xff]
    %v251 = vld [vmem:[%s235 + $0x78] sm:$0xff]
    %s252 = scalar_lea.vmem %s3, 2
    %v253 = vld [vmem:[%s252] sm:$0x1]
    %v255 = vlaneseq
    %v256 = vshrl.u32 %v255, 7
    %v257 = vsub.s32 0, %v256
    %v258 = vrot.slane %v253, %v257
    %260 = vmatprep.subr.mxu0 0.0
    %261 = vmatpush1.msra.mxu0 %v236
    %262 = vmatprep.subr.mxu0 0.0
    %263 = vmatpush1.msra.mxu0 %v237
    %264 = vmatprep.subr.mxu0 0.0
    %265 = vmatpush1.msra.mxu0 %v238
    %266 = vmatprep.subr.mxu0 0.0
    %267 = vmatpush1.msra.mxu0 %v239
    %268 = vmatprep.subr.mxu0 0.0
    %269 = vmatpush1.msra.mxu0 %v240
    %270 = vmatprep.subr.mxu0 0.0
    %271 = vmatpush1.msra.mxu0 %v241
    %272 = vmatprep.subr.mxu0 0.0
    %273 = vmatpush1.msra.mxu0 %v242
    %274 = vmatprep.subr.mxu0 0.0
    %275 = vmatpush1.msra.mxu0 %v243
    %276 = vmatprep.subr.mxu0 0.0
    %277 = vmatpush1.msra.mxu0 %v244
    %278 = vmatprep.subr.mxu0 0.0
    %279 = vmatpush1.msra.mxu0 %v245
    %280 = vmatprep.subr.mxu0 0.0
    %281 = vmatpush1.msra.mxu0 %v246
    %282 = vmatprep.subr.mxu0 0.0
    %283 = vmatpush1.msra.mxu0 %v247
    %284 = vmatprep.subr.mxu0 0.0
    %285 = vmatpush1.msra.mxu0 %v248
    %286 = vmatprep.subr.mxu0 0.0
    %287 = vmatpush1.msra.mxu0 %v249
    %288 = vmatprep.subr.mxu0 0.0
    %289 = vmatpush1.msra.mxu0 %v250
    %290 = vmatprep.subr.mxu0 0.0
    %291 = vmatpush1.msra.mxu0 %v251
    %292 = vmatprep.subr.mxu0 0.0
    %293 = vmatpush1.msra.mxu0 0.0
    %294 = vmatprep.subr.mxu0 0.0
    %295 = vmatpush1.msra.mxu0 0.0
    %296 = vmatprep.subr.mxu0 0.0
    %297 = vmatpush1.msra.mxu0 0.0
    %298 = vmatprep.subr.mxu0 0.0
    %299 = vmatpush1.msra.mxu0 0.0
    %300 = vmatprep.subr.mxu0 0.0
    %301 = vmatpush1.msra.mxu0 0.0
    %302 = vmatprep.subr.mxu0 0.0
    %303 = vmatpush1.msra.mxu0 0.0
    %304 = vmatprep.subr.mxu0 0.0
    %305 = vmatpush1.msra.mxu0 0.0
    %306 = vmatprep.subr.mxu0 0.0
    %307 = vmatpush1.msra.mxu0 0.0
    %308 = vmatprep.subr.mxu0 0.0
    %309 = vmatpush1.msra.mxu0 0.0
    %310 = vmatprep.subr.mxu0 0.0
    %311 = vmatpush1.msra.mxu0 0.0
    %312 = vmatprep.subr.mxu0 0.0
    %313 = vmatpush1.msra.mxu0 0.0
    %314 = vmatprep.subr.mxu0 0.0
    %315 = vmatpush1.msra.mxu0 0.0
    %316 = vmatprep.subr.mxu0 0.0
    %317 = vmatpush1.msra.mxu0 0.0
    %318 = vmatprep.subr.mxu0 0.0
    %319 = vmatpush1.msra.mxu0 0.0
    %320 = vmatprep.subr.mxu0 0.0
    %321 = vmatpush1.msra.mxu0 0.0
    %322 = vmatprep.subr.mxu0 0.0
    %323 = vmatpush1.msra.mxu0 0.0
    %324 = vmatprep.mubr.f32.mxu0 0.0
    %325 = vmatmul.mubr.f32.gmra.mrb[0].mxu0 %v227
    %v326 = vpop.f32.mrb[0].mxu0
    %v327 = vadd.f32 %v258, %v326
    %v328 = vpop.f32.mrb[0].mxu0
    %329 = vmatprep.mubr.f32.mxu0 0.0
    %330 = vmatmul.mubr.f32.gmra.mrb[0].mxu0 %v232
    %v331 = vpop.f32.mrb[0].mxu0
    %v332 = vadd.f32 %v258, %v331
    %v333 = vpop.f32.mrb[0].mxu0
    %334 = vdwg.mxu0
    %v335 = vmul.f32 %v327, 0.01
    %v336 = vmul.f32 %v332, 0.01
    %v337 = vmax.f32 %v327, %v335
    %v338 = vmax.f32 %v332, %v336
    %s339 = scalar_lea.vmem [#allocation2], 384
    %v340 = vld [vmem:[%s339] sm:$0xff]
    %v341 = vld [vmem:[%s339 + $0x8] sm:$0xff]
    %v342 = vld [vmem:[%s339 + $0x10] sm:$0xff]
    %v343 = vld [vmem:[%s339 + $0x18] sm:$0xff]
    %v344 = vld [vmem:[%s339 + $0x20] sm:$0xff]
    %v345 = vld [vmem:[%s339 + $0x28] sm:$0xff]
    %v346 = vld [vmem:[%s339 + $0x30] sm:$0xff]
    %v347 = vld [vmem:[%s339 + $0x38] sm:$0xff]
    %v348 = vld [vmem:[%s339 + $0x40] sm:$0xff]
    %v349 = vld [vmem:[%s339 + $0x48] sm:$0xff]
    %v350 = vld [vmem:[%s339 + $0x50] sm:$0xff]
    %v351 = vld [vmem:[%s339 + $0x58] sm:$0xff]
    %v352 = vld [vmem:[%s339 + $0x60] sm:$0xff]
    %v353 = vld [vmem:[%s339 + $0x68] sm:$0xff]
    %v354 = vld [vmem:[%s339 + $0x70] sm:$0xff]
    %v355 = vld [vmem:[%s339 + $0x78] sm:$0xff]
    %s356 = scalar_lea.vmem %s3, 3
    %v357 = vld [vmem:[%s356] sm:$0x1]
    %v359 = vlaneseq
    %v360 = vshrl.u32 %v359, 7
    %v361 = vsub.s32 0, %v360
    %v362 = vrot.slane %v357, %v361
    %364 = vmatprep.subr.mxu0 0.0
    %365 = vmatpush1.msra.mxu0 %v340
    %366 = vmatprep.subr.mxu0 0.0
    %367 = vmatpush1.msra.mxu0 %v341
    %368 = vmatprep.subr.mxu0 0.0
    %369 = vmatpush1.msra.mxu0 %v342
    %370 = vmatprep.subr.mxu0 0.0
    %371 = vmatpush1.msra.mxu0 %v343
    %372 = vmatprep.subr.mxu0 0.0
    %373 = vmatpush1.msra.mxu0 %v344
    %374 = vmatprep.subr.mxu0 0.0
    %375 = vmatpush1.msra.mxu0 %v345
    %376 = vmatprep.subr.mxu0 0.0
    %377 = vmatpush1.msra.mxu0 %v346
    %378 = vmatprep.subr.mxu0 0.0
    %379 = vmatpush1.msra.mxu0 %v347
    %380 = vmatprep.subr.mxu0 0.0
    %381 = vmatpush1.msra.mxu0 %v348
    %382 = vmatprep.subr.mxu0 0.0
    %383 = vmatpush1.msra.mxu0 %v349
    %384 = vmatprep.subr.mxu0 0.0
    %385 = vmatpush1.msra.mxu0 %v350
    %386 = vmatprep.subr.mxu0 0.0
    %387 = vmatpush1.msra.mxu0 %v351
    %388 = vmatprep.subr.mxu0 0.0
    %389 = vmatpush1.msra.mxu0 %v352
    %390 = vmatprep.subr.mxu0 0.0
    %391 = vmatpush1.msra.mxu0 %v353
    %392 = vmatprep.subr.mxu0 0.0
    %393 = vmatpush1.msra.mxu0 %v354
    %394 = vmatprep.subr.mxu0 0.0
    %395 = vmatpush1.msra.mxu0 %v355
    %396 = vmatprep.subr.mxu0 0.0
    %397 = vmatpush1.msra.mxu0 0.0
    %398 = vmatprep.subr.mxu0 0.0
    %399 = vmatpush1.msra.mxu0 0.0
    %400 = vmatprep.subr.mxu0 0.0
    %401 = vmatpush1.msra.mxu0 0.0
    %402 = vmatprep.subr.mxu0 0.0
    %403 = vmatpush1.msra.mxu0 0.0
    %404 = vmatprep.subr.mxu0 0.0
    %405 = vmatpush1.msra.mxu0 0.0
    %406 = vmatprep.subr.mxu0 0.0
    %407 = vmatpush1.msra.mxu0 0.0
    %408 = vmatprep.subr.mxu0 0.0
    %409 = vmatpush1.msra.mxu0 0.0
    %410 = vmatprep.subr.mxu0 0.0
    %411 = vmatpush1.msra.mxu0 0.0
    %412 = vmatprep.subr.mxu0 0.0
    %413 = vmatpush1.msra.mxu0 0.0
    %414 = vmatprep.subr.mxu0 0.0
    %415 = vmatpush1.msra.mxu0 0.0
    %416 = vmatprep.subr.mxu0 0.0
    %417 = vmatpush1.msra.mxu0 0.0
    %418 = vmatprep.subr.mxu0 0.0
    %419 = vmatpush1.msra.mxu0 0.0
    %420 = vmatprep.subr.mxu0 0.0
    %421 = vmatpush1.msra.mxu0 0.0
    %422 = vmatprep.subr.mxu0 0.0
    %423 = vmatpush1.msra.mxu0 0.0
    %424 = vmatprep.subr.mxu0 0.0
    %425 = vmatpush1.msra.mxu0 0.0
    %426 = vmatprep.subr.mxu0 0.0
    %427 = vmatpush1.msra.mxu0 0.0
    %428 = vmatprep.mubr.f32.mxu0 0.0
    %429 = vmatmul.mubr.f32.gmra.mrb[0].mxu0 %v337
    %v430 = vpop.f32.mrb[0].mxu0
    %v431 = vadd.f32 %v362, %v430
    %v432 = vpop.f32.mrb[0].mxu0
    %433 = vmatprep.mubr.f32.mxu0 0.0
    %434 = vmatmul.mubr.f32.gmra.mrb[0].mxu0 %v338
    %v435 = vpop.f32.mrb[0].mxu0
    %v436 = vadd.f32 %v362, %v435
    %v437 = vpop.f32.mrb[0].mxu0
    %438 = vdwg.mxu0
    %v439 = vmax.f32 %v431, 0.0
    %v440 = vmax.f32 %v436, 0.0
    %s441 = scalar_lea.vmem [#allocation2], 512
    %v442 = vld [vmem:[%s441] sm:$0xff]
    %v443 = vld [vmem:[%s441 + $0x8] sm:$0xff]
    %v444 = vld [vmem:[%s441 + $0x10] sm:$0xff]
    %v445 = vld [vmem:[%s441 + $0x18] sm:$0xff]
    %v446 = vld [vmem:[%s441 + $0x20] sm:$0xff]
    %v447 = vld [vmem:[%s441 + $0x28] sm:$0xff]
    %v448 = vld [vmem:[%s441 + $0x30] sm:$0xff]
    %v449 = vld [vmem:[%s441 + $0x38] sm:$0xff]
    %v450 = vld [vmem:[%s441 + $0x40] sm:$0xff]
    %v451 = vld [vmem:[%s441 + $0x48] sm:$0xff]
    %v452 = vld [vmem:[%s441 + $0x50] sm:$0xff]
    %v453 = vld [vmem:[%s441 + $0x58] sm:$0xff]
    %v454 = vld [vmem:[%s441 + $0x60] sm:$0xff]
    %v455 = vld [vmem:[%s441 + $0x68] sm:$0xff]
    %v456 = vld [vmem:[%s441 + $0x70] sm:$0xff]
    %v457 = vld [vmem:[%s441 + $0x78] sm:$0xff]
    %s458 = scalar_lea.vmem %s3, 4
    %v459 = vld [vmem:[%s458] sm:$0x1]
    %v461 = vlaneseq
    %v462 = vshrl.u32 %v461, 7
    %v463 = vsub.s32 0, %v462
    %v464 = vrot.slane %v459, %v463
    %466 = vmatprep.subr.mxu0 0.0
    %467 = vmatpush1.msra.mxu0 %v442
    %468 = vmatprep.subr.mxu0 0.0
    %469 = vmatpush1.msra.mxu0 %v443
    %470 = vmatprep.subr.mxu0 0.0
    %471 = vmatpush1.msra.mxu0 %v444
    %472 = vmatprep.subr.mxu0 0.0
    %473 = vmatpush1.msra.mxu0 %v445
    %474 = vmatprep.subr.mxu0 0.0
    %475 = vmatpush1.msra.mxu0 %v446
    %476 = vmatprep.subr.mxu0 0.0
    %477 = vmatpush1.msra.mxu0 %v447
    %478 = vmatprep.subr.mxu0 0.0
    %479 = vmatpush1.msra.mxu0 %v448
    %480 = vmatprep.subr.mxu0 0.0
    %481 = vmatpush1.msra.mxu0 %v449
    %482 = vmatprep.subr.mxu0 0.0
    %483 = vmatpush1.msra.mxu0 %v450
    %484 = vmatprep.subr.mxu0 0.0
    %485 = vmatpush1.msra.mxu0 %v451
    %486 = vmatprep.subr.mxu0 0.0
    %487 = vmatpush1.msra.mxu0 %v452
    %488 = vmatprep.subr.mxu0 0.0
    %489 = vmatpush1.msra.mxu0 %v453
    %490 = vmatprep.subr.mxu0 0.0
    %491 = vmatpush1.msra.mxu0 %v454
    %492 = vmatprep.subr.mxu0 0.0
    %493 = vmatpush1.msra.mxu0 %v455
    %494 = vmatprep.subr.mxu0 0.0
    %495 = vmatpush1.msra.mxu0 %v456
    %496 = vmatprep.subr.mxu0 0.0
    %497 = vmatpush1.msra.mxu0 %v457
    %498 = vmatprep.subr.mxu0 0.0
    %499 = vmatpush1.msra.mxu0 0.0
    %500 = vmatprep.subr.mxu0 0.0
    %501 = vmatpush1.msra.mxu0 0.0
    %502 = vmatprep.subr.mxu0 0.0
    %503 = vmatpush1.msra.mxu0 0.0
    %504 = vmatprep.subr.mxu0 0.0
    %505 = vmatpush1.msra.mxu0 0.0
    %506 = vmatprep.subr.mxu0 0.0
    %507 = vmatpush1.msra.mxu0 0.0
    %508 = vmatprep.subr.mxu0 0.0
    %509 = vmatpush1.msra.mxu0 0.0
    %510 = vmatprep.subr.mxu0 0.0
    %511 = vmatpush1.msra.mxu0 0.0
    %512 = vmatprep.subr.mxu0 0.0
    %513 = vmatpush1.msra.mxu0 0.0
    %514 = vmatprep.subr.mxu0 0.0
    %515 = vmatpush1.msra.mxu0 0.0
    %516 = vmatprep.subr.mxu0 0.0
    %517 = vmatpush1.msra.mxu0 0.0
    %518 = vmatprep.subr.mxu0 0.0
    %519 = vmatpush1.msra.mxu0 0.0
    %520 = vmatprep.subr.mxu0 0.0
    %521 = vmatpush1.msra.mxu0 0.0
    %522 = vmatprep.subr.mxu0 0.0
    %523 = vmatpush1.msra.mxu0 0.0
    %524 = vmatprep.subr.mxu0 0.0
    %525 = vmatpush1.msra.mxu0 0.0
    %526 = vmatprep.subr.mxu0 0.0
    %527 = vmatpush1.msra.mxu0 0.0
    %528 = vmatprep.subr.mxu0 0.0
    %529 = vmatpush1.msra.mxu0 0.0
    %530 = vmatprep.mubr.f32.mxu0 0.0
    %531 = vmatmul.mubr.f32.gmra.mrb[0].mxu0 %v439
    %v532 = vpop.f32.mrb[0].mxu0
    %v533 = vadd.f32 %v464, %v532
    %v534 = vpop.f32.mrb[0].mxu0
    %535 = vmatprep.mubr.f32.mxu0 0.0
    %536 = vmatmul.mubr.f32.gmra.mrb[0].mxu0 %v440
    %v537 = vpop.f32.mrb[0].mxu0
    %v538 = vadd.f32 %v464, %v537
    %v539 = vpop.f32.mrb[0].mxu0
    %540 = vdwg.mxu0
    %v541 = vmul.f32 %v533, 0.01
    %v542 = vmul.f32 %v538, 0.01
    %v543 = vmax.f32 %v533, %v541
    %v544 = vmax.f32 %v538, %v542
    %s545 = scalar_lea.vmem [#allocation2], 640
    %v546 = vld [vmem:[%s545] sm:$0xff]
    %v547 = vld [vmem:[%s545 + $0x8] sm:$0xff]
    %v548 = vld [vmem:[%s545 + $0x10] sm:$0xff]
    %v549 = vld [vmem:[%s545 + $0x18] sm:$0xff]
    %v550 = vld [vmem:[%s545 + $0x20] sm:$0xff]
    %v551 = vld [vmem:[%s545 + $0x28] sm:$0xff]
    %v552 = vld [vmem:[%s545 + $0x30] sm:$0xff]
    %v553 = vld [vmem:[%s545 + $0x38] sm:$0xff]
    %v554 = vld [vmem:[%s545 + $0x40] sm:$0xff]
    %v555 = vld [vmem:[%s545 + $0x48] sm:$0xff]
    %v556 = vld [vmem:[%s545 + $0x50] sm:$0xff]
    %v557 = vld [vmem:[%s545 + $0x58] sm:$0xff]
    %v558 = vld [vmem:[%s545 + $0x60] sm:$0xff]
    %v559 = vld [vmem:[%s545 + $0x68] sm:$0xff]
    %v560 = vld [vmem:[%s545 + $0x70] sm:$0xff]
    %v561 = vld [vmem:[%s545 + $0x78] sm:$0xff]
    %s562 = scalar_lea.vmem %s3, 5
    %v563 = vld [vmem:[%s562] sm:$0x1]
    %v565 = vlaneseq
    %v566 = vshrl.u32 %v565, 7
    %v567 = vsub.s32 0, %v566
    %v568 = vrot.slane %v563, %v567
    %570 = vmatprep.subr.mxu0 0.0
    %571 = vmatpush1.msra.mxu0 %v546
    %572 = vmatprep.subr.mxu0 0.0
    %573 = vmatpush1.msra.mxu0 %v547
    %574 = vmatprep.subr.mxu0 0.0
    %575 = vmatpush1.msra.mxu0 %v548
    %576 = vmatprep.subr.mxu0 0.0
    %577 = vmatpush1.msra.mxu0 %v549
    %578 = vmatprep.subr.mxu0 0.0
    %579 = vmatpush1.msra.mxu0 %v550
    %580 = vmatprep.subr.mxu0 0.0
    %581 = vmatpush1.msra.mxu0 %v551
    %582 = vmatprep.subr.mxu0 0.0
    %583 = vmatpush1.msra.mxu0 %v552
    %584 = vmatprep.subr.mxu0 0.0
    %585 = vmatpush1.msra.mxu0 %v553
    %586 = vmatprep.subr.mxu0 0.0
    %587 = vmatpush1.msra.mxu0 %v554
    %588 = vmatprep.subr.mxu0 0.0
    %589 = vmatpush1.msra.mxu0 %v555
    %590 = vmatprep.subr.mxu0 0.0
    %591 = vmatpush1.msra.mxu0 %v556
    %592 = vmatprep.subr.mxu0 0.0
    %593 = vmatpush1.msra.mxu0 %v557
    %594 = vmatprep.subr.mxu0 0.0
    %595 = vmatpush1.msra.mxu0 %v558
    %596 = vmatprep.subr.mxu0 0.0
    %597 = vmatpush1.msra.mxu0 %v559
    %598 = vmatprep.subr.mxu0 0.0
    %599 = vmatpush1.msra.mxu0 %v560
    %600 = vmatprep.subr.mxu0 0.0
    %601 = vmatpush1.msra.mxu0 %v561
    %602 = vmatprep.subr.mxu0 0.0
    %603 = vmatpush1.msra.mxu0 0.0
    %604 = vmatprep.subr.mxu0 0.0
    %605 = vmatpush1.msra.mxu0 0.0
    %606 = vmatprep.subr.mxu0 0.0
    %607 = vmatpush1.msra.mxu0 0.0
    %608 = vmatprep.subr.mxu0 0.0
    %609 = vmatpush1.msra.mxu0 0.0
    %610 = vmatprep.subr.mxu0 0.0
    %611 = vmatpush1.msra.mxu0 0.0
    %612 = vmatprep.subr.mxu0 0.0
    %613 = vmatpush1.msra.mxu0 0.0
    %614 = vmatprep.subr.mxu0 0.0
    %615 = vmatpush1.msra.mxu0 0.0
    %616 = vmatprep.subr.mxu0 0.0
    %617 = vmatpush1.msra.mxu0 0.0
    %618 = vmatprep.subr.mxu0 0.0
    %619 = vmatpush1.msra.mxu0 0.0
    %620 = vmatprep.subr.mxu0 0.0
    %621 = vmatpush1.msra.mxu0 0.0
    %622 = vmatprep.subr.mxu0 0.0
    %623 = vmatpush1.msra.mxu0 0.0
    %624 = vmatprep.subr.mxu0 0.0
    %625 = vmatpush1.msra.mxu0 0.0
    %626 = vmatprep.subr.mxu0 0.0
    %627 = vmatpush1.msra.mxu0 0.0
    %628 = vmatprep.subr.mxu0 0.0
    %629 = vmatpush1.msra.mxu0 0.0
    %630 = vmatprep.subr.mxu0 0.0
    %631 = vmatpush1.msra.mxu0 0.0
    %632 = vmatprep.subr.mxu0 0.0
    %633 = vmatpush1.msra.mxu0 0.0
    %634 = vmatprep.mubr.f32.mxu0 0.0
    %635 = vmatmul.mubr.f32.gmra.mrb[0].mxu0 %v543
    %v636 = vpop.f32.mrb[0].mxu0
    %v637 = vadd.f32 %v568, %v636
    %v638 = vpop.f32.mrb[0].mxu0
    %639 = vmatprep.mubr.f32.mxu0 0.0
    %640 = vmatmul.mubr.f32.gmra.mrb[0].mxu0 %v544
    %v641 = vpop.f32.mrb[0].mxu0
    %v642 = vadd.f32 %v568, %v641
    %v643 = vpop.f32.mrb[0].mxu0
    %644 = vdwg.mxu0
    %v645 = vld [vmem:[%s1] sm:$0x3]
    %vm646 = vcmask 113664
    %v648 = vsel %vm646, %v645, 0
    %vm650 = vcmask 1045504
    %v652 = vsel %vm650, %v642, 0
    %654 = vmatprep.subr.mxu0 0.0
    %655 = vmatpush1.msra.mxu0 %v637
    %656 = vmatprep.subr.mxu0 0.0
    %657 = vmatpush1.msra.mxu0 %v652
    %658 = vmatprep.subr.mxu0 0.0
    %659 = vmatpush1.msra.mxu0 0.0
    %660 = vmatprep.subr.mxu0 0.0
    %661 = vmatpush1.msra.mxu0 0.0
    %662 = vmatprep.subr.mxu0 0.0
    %663 = vmatpush1.msra.mxu0 0.0
    %664 = vmatprep.subr.mxu0 0.0
    %665 = vmatpush1.msra.mxu0 0.0
    %666 = vmatprep.subr.mxu0 0.0
    %667 = vmatpush1.msra.mxu0 0.0
    %668 = vmatprep.subr.mxu0 0.0
    %669 = vmatpush1.msra.mxu0 0.0
    %670 = vmatprep.subr.mxu0 0.0
    %671 = vmatpush1.msra.mxu0 0.0
    %672 = vmatprep.subr.mxu0 0.0
    %673 = vmatpush1.msra.mxu0 0.0
    %674 = vmatprep.subr.mxu0 0.0
    %675 = vmatpush1.msra.mxu0 0.0
    %676 = vmatprep.subr.mxu0 0.0
    %677 = vmatpush1.msra.mxu0 0.0
    %678 = vmatprep.subr.mxu0 0.0
    %679 = vmatpush1.msra.mxu0 0.0
    %680 = vmatprep.subr.mxu0 0.0
    %681 = vmatpush1.msra.mxu0 0.0
    %682 = vmatprep.subr.mxu0 0.0
    %683 = vmatpush1.msra.mxu0 0.0
    %684 = vmatprep.subr.mxu0 0.0
    %685 = vmatpush1.msra.mxu0 0.0
    %686 = vmatprep.subr.mxu0 0.0
    %687 = vmatpush1.msra.mxu0 0.0
    %688 = vmatprep.subr.mxu0 0.0
    %689 = vmatpush1.msra.mxu0 0.0
    %690 = vmatprep.subr.mxu0 0.0
    %691 = vmatpush1.msra.mxu0 0.0
    %692 = vmatprep.subr.mxu0 0.0
    %693 = vmatpush1.msra.mxu0 0.0
    %694 = vmatprep.subr.mxu0 0.0
    %695 = vmatpush1.msra.mxu0 0.0
    %696 = vmatprep.subr.mxu0 0.0
    %697 = vmatpush1.msra.mxu0 0.0
    %698 = vmatprep.subr.mxu0 0.0
    %699 = vmatpush1.msra.mxu0 0.0
    %700 = vmatprep.subr.mxu0 0.0
    %701 = vmatpush1.msra.mxu0 0.0
    %702 = vmatprep.subr.mxu0 0.0
    %703 = vmatpush1.msra.mxu0 0.0
    %704 = vmatprep.subr.mxu0 0.0
    %705 = vmatpush1.msra.mxu0 0.0
    %706 = vmatprep.subr.mxu0 0.0
    %707 = vmatpush1.msra.mxu0 0.0
    %708 = vmatprep.subr.mxu0 0.0
    %709 = vmatpush1.msra.mxu0 0.0
    %710 = vmatprep.subr.mxu0 0.0
    %711 = vmatpush1.msra.mxu0 0.0
    %712 = vmatprep.subr.mxu0 0.0
    %713 = vmatpush1.msra.mxu0 0.0
    %714 = vmatprep.subr.mxu0 0.0
    %715 = vmatpush1.msra.mxu0 0.0
    %716 = vmatprep.subr.mxu0 0.0
    %717 = vmatpush1.msra.mxu0 0.0
    %718 = vmatprep.mubr.f32.mxu0 0.0
    %719 = vmatmul.mubr.f32.gmra.mrb[0].mxu0 %v648
    %v720 = vpop.f32.mrb[0].mxu0
    %v721 = vadd.f32 0.0, %v720
    %v722 = vpop.f32.mrb[0].mxu0
    %723 = vdwg.mxu0
    %724 = vmatprep.subr.mxu0 0.0
    %725 = vmatpush1.xpose.msra.mxu0 %v721
    %726 = vmatprep.subr.mxu0 0.0
    %727 = vmatpush1.xpose.msra.mxu0 0.0
    %728 = vmatprep.subr.mxu0 0.0
    %729 = vmatpush1.xpose.msra.mxu0 0.0
    %730 = vmatprep.subr.mxu0 0.0
    %731 = vmatpush1.xpose.msra.mxu0 0.0
    %732 = vmatprep.subr.mxu0 0.0
    %733 = vmatpush1.xpose.msra.mxu0 0.0
    %734 = vmatprep.subr.mxu0 0.0
    %735 = vmatpush1.xpose.msra.mxu0 0.0
    %736 = vmatprep.subr.mxu0 0.0
    %737 = vmatpush1.xpose.msra.mxu0 0.0
    %738 = vmatprep.subr.mxu0 0.0
    %739 = vmatpush1.xpose.msra.mxu0 0.0
    %740 = vmatprep.subr.mxu0 0.0
    %741 = vmatpush1.xpose.msra.mxu0 0.0
    %742 = vmatprep.subr.mxu0 0.0
    %743 = vmatpush1.xpose.msra.mxu0 0.0
    %744 = vmatprep.subr.mxu0 0.0
    %745 = vmatpush1.xpose.msra.mxu0 0.0
    %746 = vmatprep.subr.mxu0 0.0
    %747 = vmatpush1.xpose.msra.mxu0 0.0
    %748 = vmatprep.subr.mxu0 0.0
    %749 = vmatpush1.xpose.msra.mxu0 0.0
    %750 = vmatprep.subr.mxu0 0.0
    %751 = vmatpush1.xpose.msra.mxu0 0.0
    %752 = vmatprep.subr.mxu0 0.0
    %753 = vmatpush1.xpose.msra.mxu0 0.0
    %754 = vmatprep.subr.mxu0 0.0
    %755 = vmatpush1.xpose.msra.mxu0 0.0
    %756 = vmatprep.subr.mxu0 0.0
    %757 = vmatpush1.xpose.msra.mxu0 0.0
    %758 = vmatprep.subr.mxu0 0.0
    %759 = vmatpush1.xpose.msra.mxu0 0.0
    %760 = vmatprep.subr.mxu0 0.0
    %761 = vmatpush1.xpose.msra.mxu0 0.0
    %762 = vmatprep.subr.mxu0 0.0
    %763 = vmatpush1.xpose.msra.mxu0 0.0
    %764 = vmatprep.subr.mxu0 0.0
    %765 = vmatpush1.xpose.msra.mxu0 0.0
    %766 = vmatprep.subr.mxu0 0.0
    %767 = vmatpush1.xpose.msra.mxu0 0.0
    %768 = vmatprep.subr.mxu0 0.0
    %769 = vmatpush1.xpose.msra.mxu0 0.0
    %770 = vmatprep.subr.mxu0 0.0
    %771 = vmatpush1.xpose.msra.mxu0 0.0
    %772 = vmatprep.subr.mxu0 0.0
    %773 = vmatpush1.xpose.msra.mxu0 0.0
    %774 = vmatprep.subr.mxu0 0.0
    %775 = vmatpush1.xpose.msra.mxu0 0.0
    %776 = vmatprep.subr.mxu0 0.0
    %777 = vmatpush1.xpose.msra.mxu0 0.0
    %778 = vmatprep.subr.mxu0 0.0
    %779 = vmatpush1.xpose.msra.mxu0 0.0
    %780 = vmatprep.subr.mxu0 0.0
    %781 = vmatpush1.xpose.msra.mxu0 0.0
    %782 = vmatprep.subr.mxu0 0.0
    %783 = vmatpush1.xpose.msra.mxu0 0.0
    %784 = vmatprep.subr.mxu0 0.0
    %785 = vmatpush1.xpose.msra.mxu0 0.0
    %786 = vmatprep.subr.mxu0 0.0
    %787 = vmatpush1.xpose.msra.mxu0 0.0
    %788 = vmatprep.mubr.f32.mxu0 0.0
    %789 = vmatmul.mubr.f32.gmra.mrb[0].mxu0 %v637
    %v790 = vpop.f32.mrb[0].mxu0
    %v791 = vpop.f32.mrb[0].mxu0
    %792 = vmatprep.mubr.f32.mxu0 0.0
    %793 = vmatmul.mubr.f32.gmra.mrb[0].mxu0 %v642
    %v794 = vpop.f32.mrb[0].mxu0
    %v795 = vadd.f32 0.0, %v794
    %v796 = vpop.f32.mrb[0].mxu0
    %797 = vdwg.mxu0
    %v798 = vmul.f32 %v642, %v642
    %v799 = vsel %vm650, %v798, 0.0
    %800 = vadd.xlane.f32.xlu0 %v799
    %v801 = vpop.xlane.xlu0 %800
    %v802 = vmul.f32 %v721, %v721
    %803 = vmatprep.subr.mxu0 0.0
    %804 = vmatpush1.xpose.msra.mxu0 %v802
    %805 = vmatprep.subr.mxu0 0.0
    %806 = vmatpush1.xpose.msra.mxu0 0.0
    %807 = vmatprep.subr.mxu0 0.0
    %808 = vmatpush1.xpose.msra.mxu0 0.0
    %809 = vmatprep.subr.mxu0 0.0
    %810 = vmatpush1.xpose.msra.mxu0 0.0
    %811 = vmatprep.subr.mxu0 0.0
    %812 = vmatpush1.xpose.msra.mxu0 0.0
    %813 = vmatprep.subr.mxu0 0.0
    %814 = vmatpush1.xpose.msra.mxu0 0.0
    %815 = vmatprep.subr.mxu0 0.0
    %816 = vmatpush1.xpose.msra.mxu0 0.0
    %817 = vmatprep.subr.mxu0 0.0
    %818 = vmatpush1.xpose.msra.mxu0 0.0
    %819 = vmatprep.subr.mxu0 0.0
    %820 = vmatpush1.xpose.msra.mxu0 0.0
    %821 = vmatprep.subr.mxu0 0.0
    %822 = vmatpush1.xpose.msra.mxu0 0.0
    %823 = vmatprep.subr.mxu0 0.0
    %824 = vmatpush1.xpose.msra.mxu0 0.0
    %825 = vmatprep.subr.mxu0 0.0
    %826 = vmatpush1.xpose.msra.mxu0 0.0
    %827 = vmatprep.subr.mxu0 0.0
    %828 = vmatpush1.xpose.msra.mxu0 0.0
    %829 = vmatprep.subr.mxu0 0.0
    %830 = vmatpush1.xpose.msra.mxu0 0.0
    %831 = vmatprep.subr.mxu0 0.0
    %832 = vmatpush1.xpose.msra.mxu0 0.0
    %833 = vmatprep.subr.mxu0 0.0
    %834 = vmatpush1.xpose.msra.mxu0 0.0
    %835 = vmatprep.subr.mxu0 0.0
    %836 = vmatpush1.xpose.msra.mxu0 0.0
    %837 = vmatprep.subr.mxu0 0.0
    %838 = vmatpush1.xpose.msra.mxu0 0.0
    %839 = vmatprep.subr.mxu0 0.0
    %840 = vmatpush1.xpose.msra.mxu0 0.0
    %841 = vmatprep.subr.mxu0 0.0
    %842 = vmatpush1.xpose.msra.mxu0 0.0
    %843 = vmatprep.subr.mxu0 0.0
    %844 = vmatpush1.xpose.msra.mxu0 0.0
    %845 = vmatprep.subr.mxu0 0.0
    %846 = vmatpush1.xpose.msra.mxu0 0.0
    %847 = vmatprep.subr.mxu0 0.0
    %848 = vmatpush1.xpose.msra.mxu0 0.0
    %849 = vmatprep.subr.mxu0 0.0
    %850 = vmatpush1.xpose.msra.mxu0 0.0
    %851 = vmatprep.subr.mxu0 0.0
    %852 = vmatpush1.xpose.msra.mxu0 0.0
    %853 = vmatprep.subr.mxu0 0.0
    %854 = vmatpush1.xpose.msra.mxu0 0.0
    %855 = vmatprep.subr.mxu0 0.0
    %856 = vmatpush1.xpose.msra.mxu0 0.0
    %857 = vmatprep.subr.mxu0 0.0
    %858 = vmatpush1.xpose.msra.mxu0 0.0
    %859 = vmatprep.subr.mxu0 0.0
    %860 = vmatpush1.xpose.msra.mxu0 0.0
    %861 = vmatprep.subr.mxu0 0.0
    %862 = vmatpush1.xpose.msra.mxu0 0.0
    %863 = vmatprep.subr.mxu0 0.0
    %864 = vmatpush1.xpose.msra.mxu0 0.0
    %865 = vmatprep.subr.mxu0 0.0
    %866 = vmatpush1.xpose.msra.mxu0 0.0
    %867 = vmatprep.mubr.f32.mxu0 0.0
    %868 = vmatmul.mubr.f32.gmra.mrb[0].mxu0 1.0
    %v869 = vpop.f32.mrb[0].mxu0
    %v870 = vadd.f32 0.0, %v869
    %v871 = vpop.f32.mrb[0].mxu0
    %872 = vdwg.mxu0
    %v873 = vmax.f32 %v801, 1e-16
    %v874 = vrsqrt.pop %v873
    %v875 = vmax.f32 %v870, 1e-16
    %v876 = vrsqrt.pop %v875
    %v877 = vmul.f32 %v795, %v874
    %v878 = vlaneseq
    %v879 = vshrl.u32 %v878, 7
    %v880 = vsub.s32 0, %v879
    %v881 = vrot.slane %v876, %v880
    %v882 = vmul.f32 %v877, %v881
    %vm883 = vcmask 13312
    %884 = vst.msk [vmem:[%s4] sm:$0x3f] %vm883, %v882
    %885 = vst [vmem:[%s5] sm:$0x3] %v721
    %886 = vst [vmem:[%s5 + $0x2] sm:$0x3f] %v642
    // Predicated region
    $region22: #{_fused_forward.1} parent=1 // pred_check
      _
    $region23: #{_fused_forward.1} parent=1 // pred_check_branch
      %888 = sbr.rel (0) target = $region25
    $region24: #{_fused_forward.1} parent=1 // pred_region
      _
    $region25: #{_fused_forward.1} parent=1 // pred_fallthru
      _
    // Predicated region
    $region26: #{_fused_forward.1} parent=1 // pred_check
      _
    $region27: #{_fused_forward.1} parent=1 // pred_check_branch
      %890 = sbr.rel (0) target = $region29
    $region28: #{_fused_forward.1} parent=1 // pred_region
      _
    $region29: #{_fused_forward.1} parent=1 // pred_fallthru
      _
    // Predicated region
    $region30: #{_fused_forward.1} parent=1 // pred_check
      _
    $region31: #{_fused_forward.1} parent=1 // pred_check_branch
      %892 = sbr.rel (0) target = $region33
    $region32: #{_fused_forward.1} parent=1 // pred_region
      _
    $region33: #{_fused_forward.1} parent=1 // pred_fallthru
      _
    // Predicated region
    $region34: #{_fused_forward.1} parent=1 // pred_check
      _
    $region35: #{_fused_forward.1} parent=1 // pred_check_branch
      %894 = sbr.rel (0) target = $region37
    $region36: #{_fused_forward.1} parent=1 // pred_region
      _
    $region37: #{_fused_forward.1} parent=1 // pred_fallthru
      _
    %895 = vsyncpa [#allocation3], 1

</llo_original>
